<compile_context>
chip_gen: v5e
topology: v5e:2x2
jax: 0.10.0
libtpu: 0.0.40
codegen_flags: <defaults>
</compile_context>

<pallas_src>
import functools

import jax
import jax.numpy as jnp
from jax import lax
from jax.experimental import pallas as pl
from jax.experimental.pallas import tpu as pltpu


def _round_up(x, m):
    return ((x + m - 1) // m) * m


def _pick_unroll(n):
    for u in (8, 4, 2):
        if n >= u and n % u == 0:
            return u
    return 1


def _accumulate_tile(x_ref, sum_acc, max_acc, start, *, hw_total, hw_tile,
                     any_padding):
    """Fold one (bB, C, hw_tile) x tile into lane-partial accumulators.

    sum_acc / max_acc are (bB, C, 128) f32 VMEM scratch.  `start` is the
    global spatial offset (in elements) of this tile.  Per step this is pure
    vld + VPU add/max on 128-lane aligned slices — no cross-lane (XLU) reduce
    and no relayout; only a partial tail tile pays for masking.
    """
    n_slices = hw_tile // 128
    unroll = _pick_unroll(n_slices)

    def unmasked(j, carry):
        off = pl.multiple_of(j * 128, 128)
        xs = x_ref[:, :, pl.ds(off, 128)].astype(jnp.float32)
        sum_acc[...] += xs
        max_acc[...] = jnp.maximum(max_acc[...], xs)
        return carry

    def masked(j, carry):
        off = pl.multiple_of(j * 128, 128)
        xs = x_ref[:, :, pl.ds(off, 128)].astype(jnp.float32)
        lane = jax.lax.broadcasted_iota(jnp.int32, xs.shape, 2) + (start + off)
        valid = lane < hw_total
        sum_acc[...] += jnp.where(valid, xs, 0.0)
        max_acc[...] = jnp.maximum(max_acc[...], jnp.where(valid, xs, -jnp.inf))
        return carry

    if not any_padding:
        lax.fori_loop(0, n_slices, unmasked, 0, unroll=unroll)
    else:
        # Fully-valid tiles take the cheap path; only the single partial tail
        # tile pays iota + compare + selects.  Fully out-of-range tiles (only
        # possible in the spatially-chunked variant) are skipped entirely.
        @pl.when(start + hw_tile <= hw_total)
        def _():
            lax.fori_loop(0, n_slices, unmasked, 0, unroll=unroll)

        @pl.when(jnp.logical_and(start < hw_total, start + hw_tile > hw_total))
        def _():
            lax.fori_loop(0, n_slices, masked, 0, unroll=unroll)


def _mlp_sigmoid(avg, mx, w1, w2, out_dtype):
    # Two small dots per layer (avoids a sublane concat in the epilogue).
    h_a = jnp.maximum(jnp.dot(avg, w1, preferred_element_type=jnp.float32), 0.0)
    h_m = jnp.maximum(jnp.dot(mx, w1, preferred_element_type=jnp.float32), 0.0)
    y = (jnp.dot(h_a, w2, preferred_element_type=jnp.float32)
         + jnp.dot(h_m, w2, preferred_element_type=jnp.float32))
    return jax.nn.sigmoid(y).astype(out_dtype)


# ----------------------------------------------------------------------------
# Fused kernel: grid (batch tiles [parallel], spatial tiles [arbitrary]).
# Pooling reduction + MLP + sigmoid all happen in-kernel.
# ----------------------------------------------------------------------------
def _fused_kernel(x_ref, w1_ref, w2_ref, o_ref, sum_acc, max_acc,
                  *, hw_total, hw_tile, any_padding):
    s = pl.program_id(1)
    n_s = pl.num_programs(1)

    @pl.when(s == 0)
    def _():
        sum_acc[...] = jnp.zeros_like(sum_acc)
        max_acc[...] = jnp.full_like(max_acc, -jnp.inf)

    _accumulate_tile(x_ref, sum_acc, max_acc, s * hw_tile,
                     hw_total=hw_total, hw_tile=hw_tile,
                     any_padding=any_padding)

    @pl.when(s == n_s - 1)
    def _():
        # One-time cross-lane reduce of the lane partials, then the tiny MLP.
        total = jnp.sum(sum_acc[...], axis=-1)                 # (bB, C)
        mx = jnp.max(max_acc[...], axis=-1)                    # (bB, C)
        avg = total * jnp.float32(1.0 / hw_total)
        o_ref[...] = _mlp_sigmoid(avg, mx, w1_ref[...], w2_ref[...],
                                  o_ref.dtype)


# ----------------------------------------------------------------------------
# Spatially-chunked variant (v7x small-batch): grid
# (spatial chunks [parallel], batch tiles [parallel], steps [arbitrary]).
# Emits per-chunk (sum, max) partials; a tiny second kernel finalizes.
# ----------------------------------------------------------------------------
def _partials_kernel(x_ref, psum_ref, pmax_ref, sum_acc, max_acc,
                     *, hw_total, hw_tile, steps_per_chunk, any_padding):
    c = pl.program_id(0)
    s = pl.program_id(2)
    n_s = pl.num_programs(2)

    @pl.when(s == 0)
    def _():
        sum_acc[...] = jnp.zeros_like(sum_acc)
        max_acc[...] = jnp.full_like(max_acc, -jnp.inf)

    start = (c * steps_per_chunk + s) * hw_tile   # unclamped global offset
    _accumulate_tile(x_ref, sum_acc, max_acc, start,
                     hw_total=hw_total, hw_tile=hw_tile,
                     any_padding=any_padding)

    @pl.when(s == n_s - 1)
    def _():
        psum_ref[0] = jnp.sum(sum_acc[...], axis=-1)
        pmax_ref[0] = jnp.max(max_acc[...], axis=-1)


def _finalize_kernel(psum_ref, pmax_ref, w1_ref, w2_ref, o_ref, *, hw_total):
    total = jnp.sum(psum_ref[...], axis=0)                     # (B, C)
    mx = jnp.max(pmax_ref[...], axis=0)                        # (B, C)
    avg = total * jnp.float32(1.0 / hw_total)
    o_ref[...] = _mlp_sigmoid(avg, mx, w1_ref[...], w2_ref[...], o_ref.dtype)


# ----------------------------------------------------------------------------
# Wrapper
# ----------------------------------------------------------------------------
def channel_attention(x, fc1_weight, fc2_weight, *, b_tile=None, hw_tile=None,
                      spatial_chunks=None):
    """x: (B, C, H, W).  fc1_weight: (Cr, C), fc2_weight: (C, Cr).

    Returns sigmoid channel attention of shape (B, C, 1, 1), matching PyTorch.
    """
    B, C, H, W = x.shape
    HW = H * W
    Cr = fc1_weight.shape[0]
    assert fc1_weight.shape == (Cr, C) and fc2_weight.shape == (C, Cr)

    x_flat = x.reshape(B, C, HW)                     # native dtype for DMA
    w1 = jnp.asarray(fc1_weight, jnp.float32).T      # (C, Cr)
    w2 = jnp.asarray(fc2_weight, jnp.float32).T      # (Cr, C)

    # --- generation-aware VMEM budget ------------------------------------
    kind = ""
    try:
        kind = jax.devices()[0].device_kind.lower()
    except Exception:
        pass
    is_v5 = "v5" in kind
    is_v7 = "v7" in kind
    # Scoped-VMEM defaults: 16 MiB on v5e, 32 MiB on v6e/v7x (v7x physical is
    # only 64 MiB, so stay near the scoped default there as well).
    scoped_vmem = (16 if is_v5 else 32) * 1024 * 1024
    # Per x double-buffer budget: v5e is the most DMA-bound + smallest VMEM
    # generation -> ~4 MiB; v6e/v7x -> ~8 MiB (amortizes per-step overhead).
    per_buf_cap = (4 if is_v5 else 8) * 1024 * 1024

    # Batch tile: full B when small, else a multiple of 8 so the (b_tile, C)
    # output block satisfies the sublane constraint.
    if b_tile is None:
        b_tile = B if B <= 8 else 8
    assert b_tile == B or b_tile % 8 == 0
    num_b = pl.cdiv(B, b_tile)

    itemsize = x_flat.dtype.itemsize
    need_lanes = _round_up(HW, 128)
    if hw_tile is None:
        lanes = max(128, (per_buf_cap // max(1, b_tile * C * itemsize))
                    // 128 * 128)
        hw_tile = min(need_lanes, lanes)
    else:
        hw_tile = min(_round_up(hw_tile, 128), need_lanes)

    def est_vmem(hwt):
        x_buf = b_tile * C * hwt * itemsize          # one x pipeline buffer
        weights = 2 * 2 * C * Cr * 4                 # two weights, 2 buffers
        scratch = 2 * b_tile * C * 128 * 4           # lane-partial accums
        outs = 4 * b_tile * C * 8                    # outputs / partials
        return 2 * x_buf + weights + scratch + outs

    headroom = 1 * 1024 * 1024
    while hw_tile > 128 and est_vmem(hw_tile) > scoped_vmem - headroom:
        hw_tile = max(128, _round_up(hw_tile // 2, 128))
    vmem_limit = None
    if est_vmem(hw_tile) > scoped_vmem - headroom:
        # Wide-channel fallback: even the 128-lane floor overflows the scoped
        # default (b_tile cannot shrink below the output sublane constraint),
        # so raise the limit explicitly instead of failing to compile.
        vmem_limit = est_vmem(hw_tile) + 2 * 1024 * 1024

    num_hw = pl.cdiv(HW, hw_tile)

    # --- path selection ---------------------------------------------------
    if spatial_chunks is None:
        # On v7x, a single batch block would leave one TensorCore idle on this
        # memory-bound kernel; split the spatial axis across two chunks.
        use_chunks = 2 if (is_v7 and num_b == 1 and num_hw >= 2) else 1
    else:
        use_chunks = max(1, int(spatial_chunks))
        if num_hw < use_chunks:
            use_chunks = 1

    scratch = [pltpu.VMEM((b_tile, C, 128), jnp.float32),   # lane-partial sum
               pltpu.VMEM((b_tile, C, 128), jnp.float32)]   # lane-partial max

    if use_chunks == 1:
        any_padding = (HW % hw_tile) != 0
        kernel = functools.partial(_fused_kernel, hw_total=HW,
                                   hw_tile=hw_tile, any_padding=any_padding)
        out = pl.pallas_call(
            kernel,
            out_shape=jax.ShapeDtypeStruct((B, C), x.dtype),
            grid_spec=pltpu.PrefetchScalarGridSpec(
                num_scalar_prefetch=0,
                grid=(num_b, num_hw),
                in_specs=[
                    pl.BlockSpec((b_tile, C, hw_tile), lambda b, s: (b, 0, s)),
                    # Weights: constant block index -> resident, no per-step DMA.
                    pl.BlockSpec((C, Cr), lambda b, s: (0, 0)),
                    pl.BlockSpec((Cr, C), lambda b, s: (0, 0)),
                ],
                out_specs=pl.BlockSpec((b_tile, C), lambda b, s: (b, 0)),
                scratch_shapes=scratch,
            ),
            compiler_params=pltpu.CompilerParams(
                dimension_semantics=("parallel", "arbitrary"),
                vmem_limit_bytes=vmem_limit),
        )(x_flat, w1, w2)
        return out.reshape(B, C, 1, 1)

    # ---- spatially-chunked path -------------------------------------------
    num_chunks = use_chunks
    spc = pl.cdiv(num_hw, num_chunks)                 # steps per chunk
    any_padding = (num_chunks * spc * hw_tile) != HW  # tail blocks / overhang

    kernel = functools.partial(_partials_kernel, hw_total=HW, hw_tile=hw_tile,
                               steps_per_chunk=spc, any_padding=any_padding)

    def x_map(c, b, s):
        # Clamp overhanging block indices; the kernel skips them via pl.when
        # on the (unclamped) global offset.
        return (b, 0, jnp.minimum(c * spc + s, num_hw - 1))

    psum, pmax = pl.pallas_call(
        kernel,
        out_shape=(jax.ShapeDtypeStruct((num_chunks, B, C), jnp.float32),
                   jax.ShapeDtypeStruct((num_chunks, B, C), jnp.float32)),
        grid_spec=pltpu.PrefetchScalarGridSpec(
            num_scalar_prefetch=0,
            grid=(num_chunks, num_b, spc),
            in_specs=[pl.BlockSpec((b_tile, C, hw_tile), x_map)],
            out_specs=[
                pl.BlockSpec((1, b_tile, C), lambda c, b, s: (c, b, 0)),
                pl.BlockSpec((1, b_tile, C), lambda c, b, s: (c, b, 0)),
            ],
            scratch_shapes=scratch,
        ),
        compiler_params=pltpu.CompilerParams(
            dimension_semantics=("parallel", "parallel", "arbitrary"),
            vmem_limit_bytes=vmem_limit),
    )(x_flat)

    fin = functools.partial(_finalize_kernel, hw_total=HW)
    out = pl.pallas_call(
        fin,
        out_shape=jax.ShapeDtypeStruct((B, C), x.dtype),
        grid_spec=pltpu.PrefetchScalarGridSpec(
            num_scalar_prefetch=0,
            grid=(1,),
            in_specs=[
                pl.BlockSpec((num_chunks, B, C), lambda i: (0, 0, 0)),
                pl.BlockSpec((num_chunks, B, C), lambda i: (0, 0, 0)),
                pl.BlockSpec((C, Cr), lambda i: (0, 0)),
                pl.BlockSpec((Cr, C), lambda i: (0, 0)),
            ],
            out_specs=pl.BlockSpec((B, C), lambda i: (0, 0)),
        ),
        compiler_params=pltpu.CompilerParams(
            dimension_semantics=("arbitrary",)),
    )(psum, pmax, w1, w2)
    return out.reshape(B, C, 1, 1)


def reference(x, fc1_weight, fc2_weight):
    # Pure-JAX reference mirroring the PyTorch forward.
    xf = x.astype(jnp.float32)
    avg = jnp.mean(xf, axis=(2, 3))
    mx = jnp.max(xf, axis=(2, 3))

    def mlp(v):
        h = jnp.maximum(v @ fc1_weight.T.astype(jnp.float32), 0.0)
        return h @ fc2_weight.T.astype(jnp.float32)

    out = mlp(avg) + mlp(mx)
    return jax.nn.sigmoid(out)[:, :, None, None].astype(x.dtype)


if __name__ == "__main__":
    key = jax.random.PRNGKey(0)
    kx, k1, k2, kx2, kx3, kx4 = jax.random.split(key, 6)

    B, C = 2, 4
    ratio = 1
    Cr = C // ratio
    fc1_w = jax.random.normal(k1, (Cr, C), dtype=jnp.float32) * 0.5
    fc2_w = jax.random.normal(k2, (C, Cr), dtype=jnp.float32) * 0.5

    def check(name, xin, **kw):
        y = jax.block_until_ready(channel_attention(xin, fc1_w, fc2_w, **kw))
        y_ref = reference(xin, fc1_w, fc2_w)
        assert y.shape == y_ref.shape
        err = jnp.max(jnp.abs(y.astype(jnp.float32) - y_ref.astype(jnp.float32)))
        assert err < 1e-5, f"{name}: max abs err {err}"

    # 1) Default fused path (single spatial step, HW = 256).
    x1 = jax.random.normal(kx, (B, C, 16, 16), dtype=jnp.float32)
    check("fused", x1)

    # 2) Fused path: multi-step spatial reduction with a masked tail (HW=400).
    x2 = jax.random.normal(kx2, (B, C, 20, 20), dtype=jnp.float32)
    check("fused-masked", x2, hw_tile=128)

    # 3) Spatially-chunked path (v7x small-batch two-TensorCore variant),
    #    forced so it is exercised on any TPU generation.  HW = 384 ->
    #    3 blocks over 2 chunks exercises the clamped / skipped tail step.
    x3 = jax.random.normal(kx3, (B, C, 16, 24), dtype=jnp.float32)
    check("chunked", x3, hw_tile=128, spatial_chunks=2)

    # 4) Chunked path with a partial (masked) final tile (HW = 400).
    check("chunked-masked", x2, hw_tile=128, spatial_chunks=2)

    # 5) Multiple batch blocks with a padded final batch block (B = 18).
    x5 = jax.random.normal(kx4, (18, C, 16, 16), dtype=jnp.float32)
    check("batch-tiled", x5)

    print("KERNEL_OK")
</pallas_src>

<mosaic_0001>
module attributes {stable_mosaic.version = 11 : i64} {
  func.func @_fused_kernel(%arg0: i32, %arg1: i32, %arg2: memref<2x4x256xf32, #tpu.memory_space<vmem>>, %arg3: memref<4x4xf32, #tpu.memory_space<vmem>>, %arg4: memref<4x4xf32, #tpu.memory_space<vmem>>, %arg5: memref<2x4xf32, #tpu.memory_space<vmem>>, %arg6: memref<2x4x128xf32, #tpu.memory_space<vmem>>, %arg7: memref<2x4x128xf32, #tpu.memory_space<vmem>>) attributes {dimension_semantics = [#tpu.dimension_semantics<parallel>, #tpu.dimension_semantics<arbitrary>], iteration_bounds = array<i64: 1, 1>, scalar_prefetch = 0 : i64, scratch_operands = 2 : i64, tpu.core_type = #tpu.core_type<tc>, window_params = [{transform_indices = @transform_0, window_bounds = array<i64: 2, 4, 256>}, {pipeline_mode = #tpu.pipeline_mode<synchronous>, transform_indices = @transform_1, window_bounds = array<i64: 4, 4>}, {pipeline_mode = #tpu.pipeline_mode<synchronous>, transform_indices = @transform_2, window_bounds = array<i64: 4, 4>}, {transform_indices = @transform_3, window_bounds = array<i64: 2, 4>}]} {
    %c0_i32 = arith.constant 0 : i32
    %0 = arith.cmpi eq, %arg1, %c0_i32 : i32
    %1 = arith.extui %0 : i1 to i32
    %c0_i32_0 = arith.constant 0 : i32
    %2 = arith.cmpi ne, %1, %c0_i32_0 : i32
    scf.if %2 {
      %cst = arith.constant 0.000000e+00 : f32
      %26 = vector.broadcast %cst : f32 to vector<2x4x128xf32>
      %c0_32 = arith.constant 0 : index
      %c0_33 = arith.constant 0 : index
      %c0_34 = arith.constant 0 : index
      %27 = vector.load %arg6[%c0_32, %c0_33, %c0_34] : memref<2x4x128xf32, #tpu.memory_space<vmem>>, vector<2x4x128xf32>
      tpu.vector_store %arg6[%c0_32, %c0_33, %c0_34], %26 {strides = array<i32>} : memref<2x4x128xf32, #tpu.memory_space<vmem>>, vector<2x4x128xf32>,
      %cst_35 = arith.constant 0xFF800000 : f32
      %28 = vector.broadcast %cst_35 : f32 to vector<2x4x128xf32>
      %c0_36 = arith.constant 0 : index
      %c0_37 = arith.constant 0 : index
      %c0_38 = arith.constant 0 : index
      %29 = vector.load %arg7[%c0_36, %c0_37, %c0_38] : memref<2x4x128xf32, #tpu.memory_space<vmem>>, vector<2x4x128xf32>
      tpu.vector_store %arg7[%c0_36, %c0_37, %c0_38], %28 {strides = array<i32>} : memref<2x4x128xf32, #tpu.memory_space<vmem>>, vector<2x4x128xf32>,
    } else {
    }
    %c0_i32_1 = arith.constant 0 : i32
    %c128_i32 = arith.constant 128 : i32
    %3 = arith.muli %c0_i32_1, %c128_i32 : i32
    %4 = tpu.assume_multiple %3, 128 : i32
    %c0 = arith.constant 0 : index
    %c0_2 = arith.constant 0 : index
    %5 = arith.index_cast %4 : i32 to index
    %6 = vector.load %arg2[%c0, %c0_2, %5] : memref<2x4x256xf32, #tpu.memory_space<vmem>>, vector<2x4x128xf32>
    %c0_3 = arith.constant 0 : index
    %c0_4 = arith.constant 0 : index
    %c0_5 = arith.constant 0 : index
    %7 = vector.load %arg6[%c0_3, %c0_4, %c0_5] : memref<2x4x128xf32, #tpu.memory_space<vmem>>, vector<2x4x128xf32>
    %8 = arith.addf %7, %6 : vector<2x4x128xf32>
    %c0_6 = arith.constant 0 : index
    %c0_7 = arith.constant 0 : index
    %c0_8 = arith.constant 0 : index
    %9 = vector.load %arg6[%c0_6, %c0_7, %c0_8] : memref<2x4x128xf32, #tpu.memory_space<vmem>>, vector<2x4x128xf32>
    tpu.vector_store %arg6[%c0_6, %c0_7, %c0_8], %8 {strides = array<i32>} : memref<2x4x128xf32, #tpu.memory_space<vmem>>, vector<2x4x128xf32>,
    %c0_9 = arith.constant 0 : index
    %c0_10 = arith.constant 0 : index
    %c0_11 = arith.constant 0 : index
    %10 = vector.load %arg7[%c0_9, %c0_10, %c0_11] : memref<2x4x128xf32, #tpu.memory_space<vmem>>, vector<2x4x128xf32>
    %11 = arith.maximumf %10, %6 : vector<2x4x128xf32>
    %c0_12 = arith.constant 0 : index
    %c0_13 = arith.constant 0 : index
    %c0_14 = arith.constant 0 : index
    %12 = vector.load %arg7[%c0_12, %c0_13, %c0_14] : memref<2x4x128xf32, #tpu.memory_space<vmem>>, vector<2x4x128xf32>
    tpu.vector_store %arg7[%c0_12, %c0_13, %c0_14], %11 {strides = array<i32>} : memref<2x4x128xf32, #tpu.memory_space<vmem>>, vector<2x4x128xf32>,
    %c1_i32 = arith.constant 1 : i32
    %c128_i32_15 = arith.constant 128 : i32
    %13 = arith.muli %c1_i32, %c128_i32_15 : i32
    %14 = tpu.assume_multiple %13, 128 : i32
    %c0_16 = arith.constant 0 : index
    %c0_17 = arith.constant 0 : index
    %15 = arith.index_cast %14 : i32 to index
    %16 = vector.load %arg2[%c0_16, %c0_17, %15] : memref<2x4x256xf32, #tpu.memory_space<vmem>>, vector<2x4x128xf32>
    %c0_18 = arith.constant 0 : index
    %c0_19 = arith.constant 0 : index
    %c0_20 = arith.constant 0 : index
    %17 = vector.load %arg6[%c0_18, %c0_19, %c0_20] : memref<2x4x128xf32, #tpu.memory_space<vmem>>, vector<2x4x128xf32>
    %18 = arith.addf %17, %16 : vector<2x4x128xf32>
    %c0_21 = arith.constant 0 : index
    %c0_22 = arith.constant 0 : index
    %c0_23 = arith.constant 0 : index
    %19 = vector.load %arg6[%c0_21, %c0_22, %c0_23] : memref<2x4x128xf32, #tpu.memory_space<vmem>>, vector<2x4x128xf32>
    tpu.vector_store %arg6[%c0_21, %c0_22, %c0_23], %18 {strides = array<i32>} : memref<2x4x128xf32, #tpu.memory_space<vmem>>, vector<2x4x128xf32>,
    %c0_24 = arith.constant 0 : index
    %c0_25 = arith.constant 0 : index
    %c0_26 = arith.constant 0 : index
    %20 = vector.load %arg7[%c0_24, %c0_25, %c0_26] : memref<2x4x128xf32, #tpu.memory_space<vmem>>, vector<2x4x128xf32>
    %21 = arith.maximumf %20, %16 : vector<2x4x128xf32>
    %c0_27 = arith.constant 0 : index
    %c0_28 = arith.constant 0 : index
    %c0_29 = arith.constant 0 : index
    %22 = vector.load %arg7[%c0_27, %c0_28, %c0_29] : memref<2x4x128xf32, #tpu.memory_space<vmem>>, vector<2x4x128xf32>
    tpu.vector_store %arg7[%c0_27, %c0_28, %c0_29], %21 {strides = array<i32>} : memref<2x4x128xf32, #tpu.memory_space<vmem>>, vector<2x4x128xf32>,
    %c2_i32 = arith.constant 2 : i32
    %c0_i32_30 = arith.constant 0 : i32
    %23 = arith.cmpi eq, %arg1, %c0_i32_30 : i32
    %24 = arith.extui %23 : i1 to i32
    %c0_i32_31 = arith.constant 0 : i32
    %25 = arith.cmpi ne, %24, %c0_i32_31 : i32
    scf.if %25 {
      %c0_32 = arith.constant 0 : index
      %c0_33 = arith.constant 0 : index
      %c0_34 = arith.constant 0 : index
      %26 = vector.load %arg6[%c0_32, %c0_33, %c0_34] : memref<2x4x128xf32, #tpu.memory_space<vmem>>, vector<2x4x128xf32>
      %cst = arith.constant dense<0.000000e+00> : vector<2x4xf32>
      %27 = vector.multi_reduction <add>, %26, %cst [2] : vector<2x4x128xf32> to vector<2x4xf32>
      %c0_35 = arith.constant 0 : index
      %c0_36 = arith.constant 0 : index
      %c0_37 = arith.constant 0 : index
      %28 = vector.load %arg7[%c0_35, %c0_36, %c0_37] : memref<2x4x128xf32, #tpu.memory_space<vmem>>, vector<2x4x128xf32>
      %cst_38 = arith.constant dense<0xFF800000> : vector<2x4xf32>
      %29 = vector.multi_reduction <maximumf>, %28, %cst_38 [2] : vector<2x4x128xf32> to vector<2x4xf32>
      %cst_39 = arith.constant 3.906250e-03 : f32
      %30 = vector.broadcast %cst_39 : f32 to vector<2x4xf32>
      %31 = arith.mulf %27, %30 : vector<2x4xf32>
      %c0_40 = arith.constant 0 : index
      %c0_41 = arith.constant 0 : index
      %32 = vector.load %arg3[%c0_40, %c0_41] : memref<4x4xf32, #tpu.memory_space<vmem>>, vector<4x4xf32>
      %c0_42 = arith.constant 0 : index
      %c0_43 = arith.constant 0 : index
      %33 = vector.load %arg4[%c0_42, %c0_43] : memref<4x4xf32, #tpu.memory_space<vmem>>, vector<4x4xf32>
      %cst_44 = arith.constant dense<0.000000e+00> : vector<2x4xf32>
      %34 = tpu.matmul %31, %32, %cst_44 {dimension_numbers = #tpu.dot_dimension_numbers<[1], [0], [0], [1], [0, 0, 1, 1], [], []>} : vector<2x4xf32>, vector<4x4xf32>, vector<2x4xf32> -> vector<2x4xf32>
      %cst_45 = arith.constant 0.000000e+00 : f32
      %35 = vector.broadcast %cst_45 : f32 to vector<2x4xf32>
      %36 = arith.maximumf %34, %35 : vector<2x4xf32>
      %cst_46 = arith.constant dense<0.000000e+00> : vector<2x4xf32>
      %37 = tpu.matmul %29, %32, %cst_46 {dimension_numbers = #tpu.dot_dimension_numbers<[1], [0], [0], [1], [0, 0, 1, 1], [], []>} : vector<2x4xf32>, vector<4x4xf32>, vector<2x4xf32> -> vector<2x4xf32>
      %cst_47 = arith.constant 0.000000e+00 : f32
      %38 = vector.broadcast %cst_47 : f32 to vector<2x4xf32>
      %39 = arith.maximumf %37, %38 : vector<2x4xf32>
      %cst_48 = arith.constant dense<0.000000e+00> : vector<2x4xf32>
      %40 = tpu.matmul %36, %33, %cst_48 {dimension_numbers = #tpu.dot_dimension_numbers<[1], [0], [0], [1], [0, 0, 1, 1], [], []>} : vector<2x4xf32>, vector<4x4xf32>, vector<2x4xf32> -> vector<2x4xf32>
      %cst_49 = arith.constant dense<0.000000e+00> : vector<2x4xf32>
      %41 = tpu.matmul %39, %33, %cst_49 {dimension_numbers = #tpu.dot_dimension_numbers<[1], [0], [0], [1], [0, 0, 1, 1], [], []>} : vector<2x4xf32>, vector<4x4xf32>, vector<2x4xf32> -> vector<2x4xf32>
      %42 = arith.addf %40, %41 : vector<2x4xf32>
      %43 = arith.negf %42 : vector<2x4xf32>
      %44 = math.exp %43 : vector<2x4xf32>
      %cst_50 = arith.constant 1.000000e+00 : f32
      %45 = vector.broadcast %cst_50 : f32 to vector<2x4xf32>
      %46 = arith.addf %45, %44 : vector<2x4xf32>
      %47 = arith.divf %45, %46 : vector<2x4xf32>
      %c0_51 = arith.constant 0 : index
      %c0_52 = arith.constant 0 : index
      %48 = vector.load %arg5[%c0_51, %c0_52] : memref<2x4xf32, #tpu.memory_space<vmem>>, vector<2x4xf32>
      tpu.vector_store %arg5[%c0_51, %c0_52], %47 {strides = array<i32>} : memref<2x4xf32, #tpu.memory_space<vmem>>, vector<2x4xf32>,
    } else {
    }
    return
  }
  func.func @transform_0(%arg0: i32, %arg1: i32) -> (i32, i32, i32) {
    %c0_i32 = arith.constant 0 : i32
    %c0_i32_0 = arith.constant 0 : i32
    return %arg0, %c0_i32, %arg1 : i32, i32, i32
  }
  func.func @transform_1(%arg0: i32, %arg1: i32) -> (i32, i32) {
    %c0_i32 = arith.constant 0 : i32
    %c0_i32_0 = arith.constant 0 : i32
    %c0_i32_1 = arith.constant 0 : i32
    return %c0_i32, %c0_i32_0 : i32, i32
  }
  func.func @transform_2(%arg0: i32, %arg1: i32) -> (i32, i32) {
    %c0_i32 = arith.constant 0 : i32
    %c0_i32_0 = arith.constant 0 : i32
    %c0_i32_1 = arith.constant 0 : i32
    return %c0_i32, %c0_i32_0 : i32, i32
  }
  func.func @transform_3(%arg0: i32, %arg1: i32) -> (i32, i32) {
    %c0_i32 = arith.constant 0 : i32
    %c0_i32_0 = arith.constant 0 : i32
    return %arg0, %c0_i32 : i32, i32
  }
}

</mosaic_0001>

<llo_original>
// kernel: tpu_custom_call.1
$region0: #{tpu_custom_call.1}
  #allocation0 [shape = 'u32[]', space=smem, size = 0x4, offset = 0x4, fixed_abs, tag = 'smem constant byte address 0x4 - core index']
  #allocation1 [shape = 'u32[72,128]{1,0:T(1,128)}', space=vmem, size = 0x9000, scoped, tag = 'internal scratch']
  #allocation2 [shape = 'f32[2,4,128]{2,1,0:T(4,128)}', space=vmem, size = 0x1000, scoped, tag = 'scratch operand']
  #allocation3 [shape = 'f32[2,4,128]{2,1,0:T(4,128)}', space=vmem, size = 0x1000, scoped, tag = 'scratch operand']
  %s0 = inlined_call_operand.hbm [shape: f32[2,4,256], index: 0, kind: input, shape index: {}]
  %s1 = inlined_call_operand.hbm [shape: f32[4,4], index: 1, kind: input, shape index: {}]
  %s2 = inlined_call_operand.hbm [shape: f32[4,4], index: 2, kind: input, shape index: {}]
  %s3 = inlined_call_operand.hbm [shape: f32[2,4], index: 3, kind: output, shape index: {}]
  %s4 = sld [smem:[#allocation0]]
  $region42: #{tpu_custom_call.1} parent=0
    _
  %s6 = ssub.s32 1, %s4
  %s7 = scalar_select 0, %s6, %s4
  $region1: #{tpu_custom_call.1} parent=0
    #allocation4 [shape = 'u8[8192]{0}', space=vmem, size = 0x2000, scoped, tag = 'input window, operand 0, single buffered']
    #allocation5 [shape = 's32[1]{0}', space=sflag, size = 0x4, scoped, tag = 'scoped memory for tpu_custom_call.1']
    #allocation6 [shape = 's32[1]{0}', space=sflag, size = 0x4, scoped, tag = 'scoped memory for tpu_custom_call.1']
    #allocation7 [shape = 'u8[2048]{0}', space=vmem, size = 0x800, scoped, tag = 'input window, operand 1, single buffered']
    #allocation8 [shape = 's32[1]{0}', space=sflag, size = 0x4, scoped, tag = 'scoped memory for tpu_custom_call.1']
    #allocation9 [shape = 'u8[2048]{0}', space=vmem, size = 0x800, scoped, tag = 'input window, operand 2, single buffered']
    #allocation10 [shape = 'u8[1024]{0}', space=vmem, size = 0x400, scoped, tag = 'output window, operand 0, single buffered']
    %8 = vsyncpa [#allocation5], 0
    %9 = vsyncpa [#allocation8], 0
    %10 = vsyncpa [#allocation6], 0
    // Predicated region
    $region2: #{tpu_custom_call.1} parent=1 // pred_check
      _
    $region3: #{tpu_custom_call.1} parent=1 // pred_check_branch
      %12 = sbr.rel (0) target = $region5
    $region4: #{tpu_custom_call.1} parent=1 // pred_region
      %14 = vsyncadd [#allocation5], 0
      %s15 = sshll.u32 %s0, 4
      %s16 = int_to_ptr.hbm [resolvable:$true] %s15
      %s17 = sshll.u32 [#allocation4], 4
      %s18 = int_to_ptr.vmem [resolvable:$true] %s17
      %23 = dma.hbm_to_vmem [thread:$0]  %s16, 256, %s18, [#allocation5], 128, 128, 8
    $region5: #{tpu_custom_call.1} parent=1 // pred_fallthru
      _
    // Predicated region
    $region6: #{tpu_custom_call.1} parent=1 // pred_check
      _
    $region7: #{tpu_custom_call.1} parent=1 // pred_check_branch
      %25 = sbr.rel (0) target = $region9
    $region8: #{tpu_custom_call.1} parent=1 // pred_region
      %27 = vsyncadd [#allocation8], 0
      %s29 = sshll.u32 %s1, 4
      %s30 = int_to_ptr.hbm [resolvable:$true] %s29
      %s31 = sshll.u32 [#allocation7], 4
      %s32 = int_to_ptr.vmem [resolvable:$true] %s31
      %34 = dma.hbm_to_vmem [thread:$0]  %s30, 64, %s32, [#allocation8]
    $region9: #{tpu_custom_call.1} parent=1 // pred_fallthru
      _
    // Predicated region
    $region10: #{tpu_custom_call.1} parent=1 // pred_check
      _
    $region11: #{tpu_custom_call.1} parent=1 // pred_check_branch
      %36 = sbr.rel (0) target = $region13
    $region12: #{tpu_custom_call.1} parent=1 // pred_region
      %38 = vsyncadd [#allocation8], 0
      %s40 = sshll.u32 %s2, 4
      %s41 = int_to_ptr.hbm [resolvable:$true] %s40
      %s42 = sshll.u32 [#allocation9], 4
      %s43 = int_to_ptr.vmem [resolvable:$true] %s42
      %45 = dma.hbm_to_vmem [thread:$0]  %s41, 64, %s43, [#allocation8]
    $region13: #{tpu_custom_call.1} parent=1 // pred_fallthru
      _
    // Predicated region
    $region14: #{tpu_custom_call.1} parent=1 // pred_check
      _
    $region15: #{tpu_custom_call.1} parent=1 // pred_check_branch
      %47 = sbr.rel (0) target = $region17
    $region16: #{tpu_custom_call.1} parent=1 // pred_region
      %49 = dma.done [#allocation5], 256
    $region17: #{tpu_custom_call.1} parent=1 // pred_fallthru
      _
    // Predicated region
    $region18: #{tpu_custom_call.1} parent=1 // pred_check
      _
    $region19: #{tpu_custom_call.1} parent=1 // pred_check_branch
      %51 = sbr.rel (0) target = $region21
    $region20: #{tpu_custom_call.1} parent=1 // pred_region
      %53 = dma.done [#allocation8], 64
    $region21: #{tpu_custom_call.1} parent=1 // pred_fallthru
      _
    // Predicated region
    $region22: #{tpu_custom_call.1} parent=1 // pred_check
      _
    $region23: #{tpu_custom_call.1} parent=1 // pred_check_branch
      %55 = sbr.rel (0) target = $region25
    $region24: #{tpu_custom_call.1} parent=1 // pred_region
      %57 = dma.done [#allocation8], 64
    $region25: #{tpu_custom_call.1} parent=1 // pred_fallthru
      _
    %p58 = scmp.eq.s32.totalorder 0, 0
    // Predicated region
    $region26: #{tpu_custom_call.1} parent=1 // pred_check
      %p59 = pneg %p58
    $region27: #{tpu_custom_call.1} parent=1 // pred_check_branch
      %61 = sbr.rel (%p59) target = $region29
    $region28: #{tpu_custom_call.1} parent=1 // pred_region
      %62 = vst [vmem:[#allocation2] sm:$0xf] 0.0
      %63 = vst [vmem:[#allocation2 + $0x4] sm:$0xf] 0.0
      %64 = vst [vmem:[#allocation3] sm:$0xf] -inf
      %65 = vst [vmem:[#allocation3 + $0x4] sm:$0xf] -inf
    $region29: #{tpu_custom_call.1} parent=1 // pred_fallthru
      _
    %v66 = vld [vmem:[#allocation4] sm:$0xf]
    %v67 = vld [vmem:[#allocation4 + $0x8] sm:$0xf]
    %v68 = vld [vmem:[#allocation2] sm:$0xf]
    %v69 = vld [vmem:[#allocation2 + $0x4] sm:$0xf]
    %v70 = vadd.f32 %v68, %v66
    %v71 = vadd.f32 %v69, %v67
    %72 = vst [vmem:[#allocation2] sm:$0xf] %v70
    %73 = vst [vmem:[#allocation2 + $0x4] sm:$0xf] %v71
    %v74 = vld [vmem:[#allocation3] sm:$0xf]
    %v75 = vld [vmem:[#allocation3 + $0x4] sm:$0xf]
    %v76 = vmax.f32 %v74, %v66
    %v77 = vmax.f32 %v75, %v67
    %78 = vst [vmem:[#allocation3] sm:$0xf] %v76
    %79 = vst [vmem:[#allocation3 + $0x4] sm:$0xf] %v77
    %s80 = scalar_lea.vmem [#allocation4], 4
    %v81 = vld [vmem:[%s80] sm:$0xf]
    %v82 = vld [vmem:[%s80 + $0x8] sm:$0xf]
    %v83 = vld [vmem:[#allocation2] sm:$0xf]
    %v84 = vld [vmem:[#allocation2 + $0x4] sm:$0xf]
    %v85 = vadd.f32 %v83, %v81
    %v86 = vadd.f32 %v84, %v82
    %87 = vst [vmem:[#allocation2] sm:$0xf] %v85
    %88 = vst [vmem:[#allocation2 + $0x4] sm:$0xf] %v86
    %v89 = vld [vmem:[#allocation3] sm:$0xf]
    %v90 = vld [vmem:[#allocation3 + $0x4] sm:$0xf]
    %v91 = vmax.f32 %v89, %v81
    %v92 = vmax.f32 %v90, %v82
    %93 = vst [vmem:[#allocation3] sm:$0xf] %v91
    %94 = vst [vmem:[#allocation3 + $0x4] sm:$0xf] %v92
    // Predicated region
    $region30: #{tpu_custom_call.1} parent=1 // pred_check
      %p95 = pneg %p58
    $region31: #{tpu_custom_call.1} parent=1 // pred_check_branch
      %97 = sbr.rel (%p95) target = $region33
    $region32: #{tpu_custom_call.1} parent=1 // pred_region
      %v98 = vld [vmem:[#allocation2] sm:$0xf]
      %v99 = vld [vmem:[#allocation2 + $0x4] sm:$0xf]
      %vm100 = vcmask 1043456
      %v101 = vsel %vm100, %v98, 0.0
      %102 = vadd.xlane.f32.xlu0 %v101
      %v103 = vpop.xlane.xlu0 %102
      %v104 = vsel %vm100, %v99, 0.0
      %105 = vadd.xlane.f32.xlu0 %v104
      %v106 = vpop.xlane.xlu0 %105
      %v107 = vld [vmem:[#allocation3] sm:$0xf]
      %v108 = vld [vmem:[#allocation3 + $0x4] sm:$0xf]
      %v109 = vsel %vm100, %v107, -inf
      %110 = vmax.xlane.f32.xlu0 %v109
      %v111 = vpop.xlane.xlu0 %110
      %v112 = vsel %vm100, %v108, -inf
      %113 = vmax.xlane.f32.xlu0 %v112
      %v114 = vpop.xlane.xlu0 %113
      %v115 = vmul.f32 %v103, 0.00390625
      %v116 = vmul.f32 %v106, 0.00390625
      %v117 = vld [vmem:[#allocation7] sm:$0xf]
      %v118 = vld [vmem:[#allocation9] sm:$0xf]
      %v121 = vlaneseq
      %v122 = vand.u32 %v121, 127
      %v123 = vperm.slane %v115, %v122
      %v124 = vperm.slane %v116, %v122
      %vm125 = vcmask 1041409
      %v126 = vsel %vm125, %v124, %v123
      %vm127 = vcmask 31744
      %v128 = vsel %vm127, %v126, 0
      %v131 = vsel %vm100, %v117, 0
      %133 = vmatpush.msra.mxu0 0.0
      %134 = vmatpush.msra.mxu0 0.0
      %135 = vmatpush.msra.mxu0 0.0
      %136 = vmatpush.msra.mxu0 0.0
      %137 = vmatpush.msra.mxu0 0.0
      %138 = vmatpush.msra.mxu0 0.0
      %139 = vmatpush.msra.mxu0 0.0
      %140 = vmatpush.msra.mxu0 0.0
      %141 = vmatpush.msra.mxu0 0.0
      %142 = vmatpush.msra.mxu0 0.0
      %143 = vmatpush.msra.mxu0 0.0
      %144 = vmatpush.msra.mxu0 0.0
      %145 = vmatpush.msra.mxu0 0.0
      %146 = vmatpush.msra.mxu0 0.0
      %147 = vmatpush.msra.mxu0 0.0
      %148 = vmatpush.msra.mxu0 %v131
      %149 = vmatmul.f32.gmra.mxu0 %v128
      %v150 = vpop.f32.mrf.mxu0
      %v151 = vadd.f32 0.0, %v150
      %152 = vdwg.mxu0
      %v153 = vmax.f32 %v151, 0.0
      %v156 = vperm.slane %v111, %v122
      %v157 = vperm.slane %v114, %v122
      %v158 = vsel %vm125, %v157, %v156
      %v159 = vsel %vm127, %v158, 0
      %161 = vmatpush.msra.mxu0 0.0
      %162 = vmatpush.msra.mxu0 0.0
      %163 = vmatpush.msra.mxu0 0.0
      %164 = vmatpush.msra.mxu0 0.0
      %165 = vmatpush.msra.mxu0 0.0
      %166 = vmatpush.msra.mxu0 0.0
      %167 = vmatpush.msra.mxu0 0.0
      %168 = vmatpush.msra.mxu0 0.0
      %169 = vmatpush.msra.mxu0 0.0
      %170 = vmatpush.msra.mxu0 0.0
      %171 = vmatpush.msra.mxu0 0.0
      %172 = vmatpush.msra.mxu0 0.0
      %173 = vmatpush.msra.mxu0 0.0
      %174 = vmatpush.msra.mxu0 0.0
      %175 = vmatpush.msra.mxu0 0.0
      %176 = vmatpush.msra.mxu0 %v131
      %177 = vmatmul.f32.gmra.mxu0 %v159
      %v178 = vpop.f32.mrf.mxu0
      %v179 = vadd.f32 0.0, %v178
      %180 = vdwg.mxu0
      %v181 = vmax.f32 %v179, 0.0
      %v183 = vsel %vm127, %v181, 0
      %v186 = vsel %vm100, %v118, 0
      %188 = vmatpush.msra.mxu0 0.0
      %189 = vmatpush.msra.mxu0 0.0
      %190 = vmatpush.msra.mxu0 0.0
      %191 = vmatpush.msra.mxu0 0.0
      %192 = vmatpush.msra.mxu0 0.0
      %193 = vmatpush.msra.mxu0 0.0
      %194 = vmatpush.msra.mxu0 0.0
      %195 = vmatpush.msra.mxu0 0.0
      %196 = vmatpush.msra.mxu0 0.0
      %197 = vmatpush.msra.mxu0 0.0
      %198 = vmatpush.msra.mxu0 0.0
      %199 = vmatpush.msra.mxu0 0.0
      %200 = vmatpush.msra.mxu0 0.0
      %201 = vmatpush.msra.mxu0 0.0
      %202 = vmatpush.msra.mxu0 0.0
      %203 = vmatpush.msra.mxu0 %v186
      %204 = vmatmul.f32.gmra.mxu0 %v183
      %v205 = vpop.f32.mrf.mxu0
      %v206 = vadd.f32 0.0, %v205
      %207 = vdwg.mxu0
      %v209 = vsel %vm127, %v153, 0
      %211 = vmatpush.msra.mxu0 0.0
      %212 = vmatpush.msra.mxu0 0.0
      %213 = vmatpush.msra.mxu0 0.0
      %214 = vmatpush.msra.mxu0 0.0
      %215 = vmatpush.msra.mxu0 0.0
      %216 = vmatpush.msra.mxu0 0.0
      %217 = vmatpush.msra.mxu0 0.0
      %218 = vmatpush.msra.mxu0 0.0
      %219 = vmatpush.msra.mxu0 0.0
      %220 = vmatpush.msra.mxu0 0.0
      %221 = vmatpush.msra.mxu0 0.0
      %222 = vmatpush.msra.mxu0 0.0
      %223 = vmatpush.msra.mxu0 0.0
      %224 = vmatpush.msra.mxu0 0.0
      %225 = vmatpush.msra.mxu0 0.0
      %226 = vmatpush.msra.mxu0 %v186
      %227 = vmatmul.f32.gmra.mxu0 %v209
      %v228 = vpop.f32.mrf.mxu0
      %v229 = vadd.f32 %v206, %v228
      %230 = vdwg.mxu0
      %v231 = vxor.u32 %v229, 2147483648
      %v232 = vmul.f32 %v231, 1.442695
      %v233 = vpow.pop %v232
      %v234 = vadd.f32 %v233, 1.0
      %v235 = vrcp.pop %v234
      %v236 = vmul.f32 %v234, %v235
      %v237 = vsub.f32 1.0, %v236
      %v238 = vmul.f32 %v235, %v237
      %v239 = vadd.f32 %v235, %v238
      %vm240 = vweird.f32 %v234
      %vm241 = vweird.f32 %v235
      %vm242 = vmor %vm240, %vm241
      %v243 = vsel %vm242, %v235, %v239
      %v244 = vand.u32 2147483647, %v234
      %vm245 = vcmp.eq.f32.partialorder %v244, 8.507059e+37
      %v246 = vand.u32 %v234, 2147483648
      %v247 = vor.u32 1.1754944e-38, %v246
      %v248 = vsel %vm245, %v247, %v243
      %v249 = vmul.f32 1.0, %v248
      %vm250 = vcmask 25600
      %251 = vst.msk [vmem:[#allocation10] sm:$0x3] %vm250, %v249
    $region33: #{tpu_custom_call.1} parent=1 // pred_fallthru
      _
    // Predicated region
    $region34: #{tpu_custom_call.1} parent=1 // pred_check
      _
    $region35: #{tpu_custom_call.1} parent=1 // pred_check_branch
      %253 = sbr.rel (0) target = $region37
    $region36: #{tpu_custom_call.1} parent=1 // pred_region
      %255 = vsyncadd [#allocation6], 0
      %s257 = sshll.u32 [#allocation10], 4
      %s258 = int_to_ptr.vmem [resolvable:$true] %s257
      %s259 = sshll.u32 %s3, 4
      %s260 = int_to_ptr.hbm [resolvable:$true] %s259
      %262 = dma.vmem_to_hbm [thread:$0]  %s258, 32, %s260, [#allocation6]
    $region37: #{tpu_custom_call.1} parent=1 // pred_fallthru
      _
    // Predicated region
    $region38: #{tpu_custom_call.1} parent=1 // pred_check
      _
    $region39: #{tpu_custom_call.1} parent=1 // pred_check_branch
      %264 = sbr.rel (0) target = $region41
    $region40: #{tpu_custom_call.1} parent=1 // pred_region
      %266 = dma.done [#allocation6], 32
    $region41: #{tpu_custom_call.1} parent=1 // pred_fallthru
      _
    %267 = vsyncpa [#allocation5], 1
    %268 = vsyncpa [#allocation8], 1
    %269 = vsyncpa [#allocation6], 1

</llo_original>
